<compile_context>
chip_gen: v5e
topology: v5e:2x2
jax: 0.10.0
libtpu: 0.0.40
codegen_flags: <defaults>
</compile_context>

<pallas_src>
import math

import jax
import jax.numpy as jnp
import numpy as np
from jax import lax
from jax.experimental import pallas as pl
from jax.experimental.pallas import tpu as pltpu

WATER_UNIT_WEIGHT = 9.81
MIN_STRESS = 10.0
NEARZERO_DELTA = 1e-6

C1 = 0.3 * math.exp(-1.0)   # coefficient of adj[j-1]
C2 = 0.3 * math.exp(-2.0)   # coefficient of adj[j-2]

# Truncated impulse-response length of adj[j] = gw[j] + C1*adj[j-1] + C2*adj[j-2].
# Dominant root of x^2 = C1*x + C2 is ~0.264, so h[16] ~ 1e-10: truncation error
# is far below f32 eps for any realistic groundwater magnitude.
K_TAPS = 16

# parameter order == parameter_bounds insertion order
PARAM_NAMES = ["parLT", "parVR", "parVCI", "parRC", "parOCR", "parK", "parMv", "parIES"]
PARAM_LO = np.zeros((8,), np.float32)
PARAM_HI = np.array([50.0, 1.0, 5.0, 1.0, 1.0, 100.0, 10.0, 100.0], np.float32)


# --------------------------------------------------------------------------- #
# Constant banded tap matrices (built once on the host with numpy).
# --------------------------------------------------------------------------- #
def _impulse_response():
    h = [1.0, C1]
    while len(h) < K_TAPS:
        h.append(C1 * h[-1] + C2 * h[-2])
    # fold stress_delta = 9.81 * adj into the taps
    return np.asarray(h, np.float64) * WATER_UNIT_WEIGHT


def _band_matrix(t_rows, first_tile):
    """[t_rows, t_rows] lower-banded Toeplitz: stress_delta = B @ gw (within tile)."""
    taps = _impulse_response()
    b = np.zeros((t_rows, t_rows), np.float64)
    for i in range(t_rows):
        for k in range(min(i, K_TAPS - 1) + 1):
            b[i, i - k] = taps[k]
    if first_tile:
        # Exact j==1 boundary: the recurrence uses adj[1] = gw[1] (NOT
        # gw[1] + C1*gw[0]); i.e. the effective FIR input at step 1 is
        # gw[1] - C1*gw[0].  Fold the propagation of -C1*gw[0] into column 0.
        for i in range(1, min(t_rows, K_TAPS + 1)):
            b[i, 0] -= C1 * taps[i - 1]
    return b.astype(np.float32)


def _halo_matrix(t_rows):
    """[t_rows, 16] taps hitting the last 16 rows of the previous time tile."""
    taps = _impulse_response()
    bh = np.zeros((t_rows, K_TAPS), np.float64)
    for i in range(min(t_rows, K_TAPS - 1)):
        for m in range(i + 1, K_TAPS):
            bh[i, m] = taps[K_TAPS + i - m]
    return bh.astype(np.float32)


# --------------------------------------------------------------------------- #
# Kernels
# --------------------------------------------------------------------------- #
def _terzaghi_block(stress_delta, p_ref, out_ref):
    """Terzaghi compression for one [Tt, St] tile given the stress change."""
    parLT = p_ref[0:1, :]
    parVR = p_ref[1:2, :]
    parVCI = p_ref[2:3, :]
    parRC = p_ref[3:4, :]
    parOCR = p_ref[4:5, :]
    parK = p_ref[5:6, :]
    parIES = p_ref[7:8, :]

    # ---- per-site constants, hoisted out of the time axis (all [1, St]) ----
    inv_vr = 1.0 / (1.0 + parVR)
    stress_0 = jnp.maximum(parIES, MIN_STRESS)
    inv_s0 = 1.0 / stress_0
    precon_p = jnp.maximum(stress_0 * parOCR, MIN_STRESS)
    inv_pc = 1.0 / precon_p
    coef_rc = parLT * parRC * inv_vr
    coef_v_vci = parLT * inv_vr * parVCI
    virgin_c = parLT * inv_vr * parRC * jnp.log(precon_p * inv_s0)   # per-site log only
    fine_fac = 0.5 + 0.5 * jnp.clip((100.0 - parK) * 0.01, 0.0, 1.0)
    w = parVCI * (1.0 + parVR) * (100.0 - parK) * 0.01               # single-layer weight
    layer_w = jnp.where(w > 0.0, 1.0, w)
    out_scale = fine_fac * layer_w * 1000.0                          # mm + weights, fused

    # ---- [Tt, St] compression: two full-size logs, rest is per-site consts ----
    stress_final = jnp.maximum(stress_0 + stress_delta, MIN_STRESS)
    recompress = coef_rc * jnp.log(stress_final * inv_s0)
    virgin = virgin_c + coef_v_vci * jnp.log(stress_final * inv_pc)
    comp = jnp.where(stress_final <= precon_p, recompress, virgin)
    out_ref[...] = jnp.where(jnp.abs(stress_delta) < NEARZERO_DELTA, 0.0, comp * out_scale)


def _kernel_single(b_ref, gw_ref, p_ref, out_ref):
    # Whole time axis in one tile: stress_delta = B @ gw on the MXU.
    stress_delta = jnp.dot(
        b_ref[...], gw_ref[...],
        preferred_element_type=jnp.float32, precision=lax.Precision.HIGHEST)
    _terzaghi_block(stress_delta, p_ref, out_ref)


def _kernel_tiled(b_ref, bh_ref, gw_ref, halo_ref, p_ref, out_ref):
    # b_ref:    [1, Tt, Tt] band matrix (variant 0 carries the j==1 boundary
    #           fix and is selected by the index_map for the first time tile).
    # halo_ref: [16, St] = last 16 rows of the previous time tile (clamped to
    #           tile 0 for the first tile, where it is masked to zero history).
    halo_on = jnp.where(pl.program_id(0) == 0, 0.0, 1.0)
    stress_delta = jnp.dot(
        b_ref[0], gw_ref[...],
        preferred_element_type=jnp.float32, precision=lax.Precision.HIGHEST)
    stress_delta = stress_delta + jnp.dot(
        bh_ref[...], halo_on * halo_ref[...],
        preferred_element_type=jnp.float32, precision=lax.Precision.HIGHEST)
    _terzaghi_block(stress_delta, p_ref, out_ref)


# --------------------------------------------------------------------------- #
# Host wrapper
# --------------------------------------------------------------------------- #
def _round_up(x, m):
    return ((x + m - 1) // m) * m


def _prepare_site_params(parameters, attributes):
    """unpack_parameters + descale_params (static params -> last time step only).

    parameters: [T, S, 1] raw NN output; attributes: [T, S, 1, 8, 1] in [0, 1].
    Returns [8, S] physical parameter values (rows follow PARAM_NAMES).
    """
    raw_last = attributes[-1, :, 0, :, 0].astype(jnp.float32)         # [S, 8]
    sig = jax.nn.sigmoid(parameters[-1, :, 0].astype(jnp.float32))    # learnable parLT -> idx 0
    raw_last = raw_last.at[:, 0].set(sig)
    scaled = raw_last * (PARAM_HI - PARAM_LO)[None, :] + PARAM_LO[None, :]
    return jnp.transpose(scaled).astype(jnp.float32)                  # [8, S]


def terzaghi_forward(x_phy, attributes, parameters, *, t_tile=None, s_tile=None):
    gw = x_phy.astype(jnp.float32)
    n_steps, n_sites = gw.shape
    p = _prepare_site_params(parameters, attributes)                  # [8, S]

    # Lane-dense site tiling (pad sites only if not already aligned).
    if s_tile is None:
        s_tile = 512 if n_sites > 512 else _round_up(max(n_sites, 1), 128)
    s_tile = _round_up(s_tile, 128)
    s_pad = _round_up(n_sites, s_tile)

    # Time tiling: single tile for small T; otherwise 128-row tiles on a
    # parallel grid axis with a 16-row history halo between tiles.
    if t_tile is None:
        t_tile = 128 if n_steps > 256 else 0
    multi = (t_tile > 0) and (n_steps > t_tile)
    if multi:
        t_tile = max(_round_up(t_tile, K_TAPS), 2 * K_TAPS)
        t_pad = _round_up(n_steps, t_tile)
    else:
        t_tile = t_pad = _round_up(n_steps, 8)

    gw_p = gw if (t_pad, s_pad) == (n_steps, n_sites) else (
        jnp.zeros((t_pad, s_pad), jnp.float32).at[:n_steps, :n_sites].set(gw))
    p_p = p if s_pad == n_sites else (
        jnp.zeros((8, s_pad), jnp.float32).at[:, :n_sites].set(p))

    cparams = pltpu.CompilerParams(
        dimension_semantics=("parallel",) * (2 if multi else 1),
        vmem_limit_bytes=32 * 1024 * 1024,
    )

    if not multi:
        band = jnp.asarray(_band_matrix(t_pad, True))                 # [Tp, Tp]
        vert = pl.pallas_call(
            _kernel_single,
            out_shape=jax.ShapeDtypeStruct((t_pad, s_pad), jnp.float32),
            grid=(s_pad // s_tile,),
            in_specs=[
                pl.BlockSpec((t_pad, t_pad), lambda s: (0, 0)),
                pl.BlockSpec((t_pad, s_tile), lambda s: (0, s)),
                pl.BlockSpec((8, s_tile), lambda s: (0, s)),
            ],
            out_specs=pl.BlockSpec((t_pad, s_tile), lambda s: (0, s)),
            compiler_params=cparams,
        )(band, gw_p, p_p)
    else:
        band = jnp.asarray(np.stack([_band_matrix(t_tile, True),
                                     _band_matrix(t_tile, False)]))   # [2, Tt, Tt]
        halo_m = jnp.asarray(_halo_matrix(t_tile))                    # [Tt, 16]
        halo_blk = t_tile // K_TAPS
        vert = pl.pallas_call(
            _kernel_tiled,
            out_shape=jax.ShapeDtypeStruct((t_pad, s_pad), jnp.float32),
            grid=(t_pad // t_tile, s_pad // s_tile),
            in_specs=[
                pl.BlockSpec((1, t_tile, t_tile),
                             lambda t, s: (jnp.minimum(t, 1), 0, 0)),
                pl.BlockSpec((t_tile, K_TAPS), lambda t, s: (0, 0)),
                pl.BlockSpec((t_tile, s_tile), lambda t, s: (t, s)),
                pl.BlockSpec((K_TAPS, s_tile),
                             lambda t, s: (jnp.maximum(t * halo_blk - 1, 0), s)),
                pl.BlockSpec((8, s_tile), lambda t, s: (0, s)),
            ],
            out_specs=pl.BlockSpec((t_tile, s_tile), lambda t, s: (t, s)),
            compiler_params=cparams,
        )(band, halo_m, gw_p, gw_p, p_p)

    return {"vert_displacement": vert[:n_steps, :n_sites]}


# --------------------------------------------------------------------------- #
# Pure-JAX reference (mirrors the original PyTorch recurrence semantics).
# --------------------------------------------------------------------------- #
def _reference(gw, p):
    gw = gw.astype(jnp.float32)
    n_steps = gw.shape[0]
    rows = [gw[0], gw[1]]
    for j in range(2, n_steps):
        rows.append(gw[j] + C2 * rows[j - 2] + C1 * rows[j - 1])
    adj = jnp.stack(rows, axis=0)

    parLT, parVR, parVCI, parRC, parOCR, parK, _, parIES = [p[i][None, :] for i in range(8)]
    stress_delta = adj * WATER_UNIT_WEIGHT
    stress_0 = jnp.maximum(parIES, MIN_STRESS)
    stress_final = jnp.maximum(stress_0 + stress_delta, MIN_STRESS)
    precon_p = jnp.maximum(stress_0 * parOCR, MIN_STRESS)
    recompress = parLT * parRC / (1.0 + parVR) * jnp.log(stress_final / stress_0)
    virgin = parLT / (1.0 + parVR) * (
        parRC * jnp.log(precon_p / stress_0) + parVCI * jnp.log(stress_final / precon_p))
    comp = jnp.where(stress_final <= precon_p, recompress, virgin)
    fine_frac = jnp.clip((100.0 - parK) / 100.0, 0.0, 1.0)
    comp = comp * (0.5 + 0.5 * fine_frac)
    comp = jnp.where(jnp.abs(stress_delta) < NEARZERO_DELTA, 0.0, comp)
    w = parVCI * (1.0 + parVR) * (100.0 - parK) / 100.0
    layer_w = jnp.where(w > 0.0, 1.0, w)
    return comp * layer_w * 1000.0


if __name__ == "__main__":
    key = jax.random.PRNGKey(0)
    k1, k2, k3, k4, k5, k6 = jax.random.split(key, 6)

    # Case 1: module-default small shapes (single time tile, MXU band matmul).
    T, S = 8, 16
    x_phy = jax.random.normal(k1, (T, S), jnp.float32) * 2.0            # gw_level
    parameters = jax.random.normal(k2, (T, S, 1), jnp.float32)          # NN output (parLT)
    attributes = jax.random.uniform(k3, (T, S, 1, 8, 1), jnp.float32)   # [T,S,layers,params,nmul]

    out = terzaghi_forward(x_phy, attributes, parameters)
    vd = jax.block_until_ready(out["vert_displacement"])
    ref = _reference(x_phy, _prepare_site_params(parameters, attributes))
    assert vd.shape == (T, S) and vd.dtype == jnp.float32
    assert bool(jnp.all(jnp.isfinite(vd)))
    # Outputs are O(1e3..1e6) mm, so rtol=2e-4 / atol=0.1 is a tight check.
    assert jnp.allclose(vd, ref, rtol=2e-4, atol=1e-1), "kernel/reference mismatch (small)"

    # Case 2: exercise the time-tiled (halo + two-axis-parallel grid) path.
    T2, S2 = 96, 256
    x2 = jax.random.normal(k4, (T2, S2), jnp.float32) * 2.0
    p2 = jax.random.normal(k5, (T2, S2, 1), jnp.float32)
    a2 = jax.random.uniform(k6, (T2, S2, 1, 8, 1), jnp.float32)
    out2 = terzaghi_forward(x2, a2, p2, t_tile=32, s_tile=128)
    vd2 = jax.block_until_ready(out2["vert_displacement"])
    ref2 = _reference(x2, _prepare_site_params(p2, a2))
    assert vd2.shape == (T2, S2)
    assert bool(jnp.all(jnp.isfinite(vd2)))
    assert jnp.allclose(vd2, ref2, rtol=2e-4, atol=1e-1), "kernel/reference mismatch (tiled)"

    print("KERNEL_OK")
</pallas_src>

<mosaic_0001>
module attributes {stable_mosaic.version = 11 : i64} {
  func.func @_kernel_single(%arg0: i32, %arg1: memref<8x8xf32, #tpu.memory_space<vmem>>, %arg2: memref<8x128xf32, #tpu.memory_space<vmem>>, %arg3: memref<8x128xf32, #tpu.memory_space<vmem>>, %arg4: memref<8x128xf32, #tpu.memory_space<vmem>>) attributes {dimension_semantics = [#tpu.dimension_semantics<parallel>], iteration_bounds = array<i64: 1>, scalar_prefetch = 0 : i64, scratch_operands = 0 : i64, tpu.core_type = #tpu.core_type<tc>, window_params = [{pipeline_mode = #tpu.pipeline_mode<synchronous>, transform_indices = @transform_0, window_bounds = array<i64: 8, 8>}, {transform_indices = @transform_1, window_bounds = array<i64: 8, 128>}, {transform_indices = @transform_2, window_bounds = array<i64: 8, 128>}, {transform_indices = @transform_3, window_bounds = array<i64: 8, 128>}]} {
    %c0 = arith.constant 0 : index
    %c0_0 = arith.constant 0 : index
    %0 = vector.load %arg1[%c0, %c0_0] : memref<8x8xf32, #tpu.memory_space<vmem>>, vector<8x8xf32>
    %c0_1 = arith.constant 0 : index
    %c0_2 = arith.constant 0 : index
    %1 = vector.load %arg2[%c0_1, %c0_2] : memref<8x128xf32, #tpu.memory_space<vmem>>, vector<8x128xf32>
    %cst = arith.constant dense<0.000000e+00> : vector<8x128xf32>
    %2 = tpu.matmul %0, %1, %cst {dimension_numbers = #tpu.dot_dimension_numbers<[1], [0], [0], [1], [0, 0, 1, 1], [], []>, precision = #tpu.contract_precision<fp32>} : vector<8x8xf32>, vector<8x128xf32>, vector<8x128xf32> -> vector<8x128xf32>
    %c0_3 = arith.constant 0 : index
    %c0_4 = arith.constant 0 : index
    %3 = vector.load %arg3[%c0_3, %c0_4] : memref<8x128xf32, #tpu.memory_space<vmem>>, vector<1x128xf32>
    %c1 = arith.constant 1 : index
    %c0_5 = arith.constant 0 : index
    %4 = vector.load %arg3[%c1, %c0_5] : memref<8x128xf32, #tpu.memory_space<vmem>>, vector<1x128xf32>
    %c2 = arith.constant 2 : index
    %c0_6 = arith.constant 0 : index
    %5 = vector.load %arg3[%c2, %c0_6] : memref<8x128xf32, #tpu.memory_space<vmem>>, vector<1x128xf32>
    %c3 = arith.constant 3 : index
    %c0_7 = arith.constant 0 : index
    %6 = vector.load %arg3[%c3, %c0_7] : memref<8x128xf32, #tpu.memory_space<vmem>>, vector<1x128xf32>
    %c4 = arith.constant 4 : index
    %c0_8 = arith.constant 0 : index
    %7 = vector.load %arg3[%c4, %c0_8] : memref<8x128xf32, #tpu.memory_space<vmem>>, vector<1x128xf32>
    %c5 = arith.constant 5 : index
    %c0_9 = arith.constant 0 : index
    %8 = vector.load %arg3[%c5, %c0_9] : memref<8x128xf32, #tpu.memory_space<vmem>>, vector<1x128xf32>
    %c7 = arith.constant 7 : index
    %c0_10 = arith.constant 0 : index
    %9 = vector.load %arg3[%c7, %c0_10] : memref<8x128xf32, #tpu.memory_space<vmem>>, vector<1x128xf32>
    %cst_11 = arith.constant 1.000000e+00 : f32
    %10 = vector.broadcast %cst_11 : f32 to vector<1x128xf32>
    %11 = arith.addf %10, %4 : vector<1x128xf32>
    %cst_12 = arith.constant 1.000000e+00 : f32
    %12 = vector.broadcast %cst_12 : f32 to vector<1x128xf32>
    %13 = arith.divf %12, %11 : vector<1x128xf32>
    %cst_13 = arith.constant 1.000000e+01 : f32
    %14 = vector.broadcast %cst_13 : f32 to vector<1x128xf32>
    %15 = arith.maximumf %9, %14 : vector<1x128xf32>
    %cst_14 = arith.constant 1.000000e+00 : f32
    %16 = vector.broadcast %cst_14 : f32 to vector<1x128xf32>
    %17 = arith.divf %16, %15 : vector<1x128xf32>
    %18 = arith.mulf %15, %7 : vector<1x128xf32>
    %cst_15 = arith.constant 1.000000e+01 : f32
    %19 = vector.broadcast %cst_15 : f32 to vector<1x128xf32>
    %20 = arith.maximumf %18, %19 : vector<1x128xf32>
    %cst_16 = arith.constant 1.000000e+00 : f32
    %21 = vector.broadcast %cst_16 : f32 to vector<1x128xf32>
    %22 = arith.divf %21, %20 : vector<1x128xf32>
    %23 = arith.mulf %3, %6 : vector<1x128xf32>
    %24 = arith.mulf %23, %13 : vector<1x128xf32>
    %25 = arith.mulf %3, %13 : vector<1x128xf32>
    %26 = arith.mulf %25, %5 : vector<1x128xf32>
    %27 = arith.mulf %3, %13 : vector<1x128xf32>
    %28 = arith.mulf %27, %6 : vector<1x128xf32>
    %29 = arith.mulf %20, %17 : vector<1x128xf32>
    %30 = math.log %29 : vector<1x128xf32>
    %31 = arith.mulf %28, %30 : vector<1x128xf32>
    %cst_17 = arith.constant 1.000000e+02 : f32
    %32 = vector.broadcast %cst_17 : f32 to vector<1x128xf32>
    %33 = arith.subf %32, %8 : vector<1x128xf32>
    %cst_18 = arith.constant 0.00999999977 : f32
    %34 = vector.broadcast %cst_18 : f32 to vector<1x128xf32>
    %35 = arith.mulf %33, %34 : vector<1x128xf32>
    %cst_19 = arith.constant 0.000000e+00 : f32
    %cst_20 = arith.constant 1.000000e+00 : f32
    %36 = vector.broadcast %cst_19 : f32 to vector<1x128xf32>
    %37 = arith.maximumf %36, %35 : vector<1x128xf32>
    %38 = vector.broadcast %cst_20 : f32 to vector<1x128xf32>
    %39 = arith.minimumf %38, %37 : vector<1x128xf32>
    %cst_21 = arith.constant 5.000000e-01 : f32
    %40 = vector.broadcast %cst_21 : f32 to vector<1x128xf32>
    %41 = arith.mulf %40, %39 : vector<1x128xf32>
    %cst_22 = arith.constant 5.000000e-01 : f32
    %42 = vector.broadcast %cst_22 : f32 to vector<1x128xf32>
    %43 = arith.addf %42, %41 : vector<1x128xf32>
    %cst_23 = arith.constant 1.000000e+00 : f32
    %44 = vector.broadcast %cst_23 : f32 to vector<1x128xf32>
    %45 = arith.addf %44, %4 : vector<1x128xf32>
    %46 = arith.mulf %5, %45 : vector<1x128xf32>
    %cst_24 = arith.constant 1.000000e+02 : f32
    %47 = vector.broadcast %cst_24 : f32 to vector<1x128xf32>
    %48 = arith.subf %47, %8 : vector<1x128xf32>
    %49 = arith.mulf %46, %48 : vector<1x128xf32>
    %cst_25 = arith.constant 0.00999999977 : f32
    %50 = vector.broadcast %cst_25 : f32 to vector<1x128xf32>
    %51 = arith.mulf %49, %50 : vector<1x128xf32>
    %cst_26 = arith.constant 0.000000e+00 : f32
    %52 = vector.broadcast %cst_26 : f32 to vector<1x128xf32>
    %53 = arith.cmpf ogt, %51, %52 : vector<1x128xf32>
    %cst_27 = arith.constant 1.000000e+00 : f32
    %54 = vector.broadcast %cst_27 : f32 to vector<1x128xf32>
    %55 = arith.select %53, %54, %51 : vector<1x128xi1>, vector<1x128xf32>
    %56 = arith.mulf %43, %55 : vector<1x128xf32>
    %cst_28 = arith.constant 1.000000e+03 : f32
    %57 = vector.broadcast %cst_28 : f32 to vector<1x128xf32>
    %58 = arith.mulf %56, %57 : vector<1x128xf32>
    %59 = vector.broadcast %15 : vector<1x128xf32> to vector<8x128xf32>
    %60 = arith.addf %59, %2 : vector<8x128xf32>
    %cst_29 = arith.constant 1.000000e+01 : f32
    %61 = vector.broadcast %cst_29 : f32 to vector<8x128xf32>
    %62 = arith.maximumf %60, %61 : vector<8x128xf32>
    %63 = vector.broadcast %17 : vector<1x128xf32> to vector<8x128xf32>
    %64 = arith.mulf %62, %63 : vector<8x128xf32>
    %65 = math.log %64 : vector<8x128xf32>
    %66 = vector.broadcast %24 : vector<1x128xf32> to vector<8x128xf32>
    %67 = arith.mulf %66, %65 : vector<8x128xf32>
    %68 = vector.broadcast %22 : vector<1x128xf32> to vector<8x128xf32>
    %69 = arith.mulf %62, %68 : vector<8x128xf32>
    %70 = math.log %69 : vector<8x128xf32>
    %71 = vector.broadcast %26 : vector<1x128xf32> to vector<8x128xf32>
    %72 = arith.mulf %71, %70 : vector<8x128xf32>
    %73 = vector.broadcast %31 : vector<1x128xf32> to vector<8x128xf32>
    %74 = arith.addf %73, %72 : vector<8x128xf32>
    %75 = vector.broadcast %20 : vector<1x128xf32> to vector<8x128xf32>
    %76 = arith.cmpf ole, %62, %75 : vector<8x128xf32>
    %77 = arith.select %76, %67, %74 : vector<8x128xi1>, vector<8x128xf32>
    %78 = math.absf %2 : vector<8x128xf32>
    %cst_30 = arith.constant 9.99999997E-7 : f32
    %79 = vector.broadcast %cst_30 : f32 to vector<8x128xf32>
    %80 = arith.cmpf olt, %78, %79 : vector<8x128xf32>
    %81 = vector.broadcast %58 : vector<1x128xf32> to vector<8x128xf32>
    %82 = arith.mulf %77, %81 : vector<8x128xf32>
    %cst_31 = arith.constant 0.000000e+00 : f32
    %83 = vector.broadcast %cst_31 : f32 to vector<8x128xf32>
    %84 = arith.select %80, %83, %82 : vector<8x128xi1>, vector<8x128xf32>
    %c0_32 = arith.constant 0 : index
    %c0_33 = arith.constant 0 : index
    %85 = vector.load %arg4[%c0_32, %c0_33] : memref<8x128xf32, #tpu.memory_space<vmem>>, vector<8x128xf32>
    tpu.vector_store %arg4[%c0_32, %c0_33], %84 {strides = array<i32>} : memref<8x128xf32, #tpu.memory_space<vmem>>, vector<8x128xf32>,
    return
  }
  func.func @transform_0(%arg0: i32) -> (i32, i32) {
    %c0_i32 = arith.constant 0 : i32
    %c0_i32_0 = arith.constant 0 : i32
    %c0_i32_1 = arith.constant 0 : i32
    return %c0_i32, %c0_i32_0 : i32, i32
  }
  func.func @transform_1(%arg0: i32) -> (i32, i32) {
    %c0_i32 = arith.constant 0 : i32
    %c0_i32_0 = arith.constant 0 : i32
    return %c0_i32, %arg0 : i32, i32
  }
  func.func @transform_2(%arg0: i32) -> (i32, i32) {
    %c0_i32 = arith.constant 0 : i32
    %c0_i32_0 = arith.constant 0 : i32
    return %c0_i32, %arg0 : i32, i32
  }
  func.func @transform_3(%arg0: i32) -> (i32, i32) {
    %c0_i32 = arith.constant 0 : i32
    %c0_i32_0 = arith.constant 0 : i32
    return %c0_i32, %arg0 : i32, i32
  }
}

</mosaic_0001>

<llo_original>
// kernel: tpu_custom_call.1
$region0: #{tpu_custom_call.1}
  #allocation0 [shape = 'u32[]', space=smem, size = 0x4, offset = 0x4, fixed_abs, tag = 'smem constant byte address 0x4 - core index']
  #allocation1 [shape = 'u32[72,128]{1,0:T(1,128)}', space=vmem, size = 0x9000, scoped, tag = 'internal scratch']
  %s0 = inlined_call_operand.hbm [shape: f32[8,8], index: 0, kind: input, shape index: {}]
  %s1 = inlined_call_operand.hbm [shape: f32[8,128], index: 1, kind: input, shape index: {}]
  %s2 = inlined_call_operand.hbm [shape: f32[8,128], index: 2, kind: input, shape index: {}]
  %s3 = inlined_call_operand.hbm [shape: f32[8,128], index: 3, kind: output, shape index: {}]
  %s4 = sld [smem:[#allocation0]]
  $region34: #{tpu_custom_call.1} parent=0
    _
  %s6 = ssub.s32 1, %s4
  %s7 = scalar_select 0, %s6, %s4
  $region1: #{tpu_custom_call.1} parent=0
    #allocation2 [shape = 'u8[4096]{0}', space=vmem, size = 0x1000, scoped, tag = 'input window, operand 0, single buffered']
    #allocation3 [shape = 's32[1]{0}', space=sflag, size = 0x4, scoped, tag = 'scoped memory for tpu_custom_call.1']
    #allocation4 [shape = 's32[1]{0}', space=sflag, size = 0x4, scoped, tag = 'scoped memory for tpu_custom_call.1']
    #allocation5 [shape = 'u8[4096]{0}', space=vmem, size = 0x1000, scoped, tag = 'input window, operand 1, single buffered']
    #allocation6 [shape = 's32[1]{0}', space=sflag, size = 0x4, scoped, tag = 'scoped memory for tpu_custom_call.1']
    #allocation7 [shape = 'u8[4096]{0}', space=vmem, size = 0x1000, scoped, tag = 'input window, operand 2, single buffered']
    #allocation8 [shape = 'u8[4096]{0}', space=vmem, size = 0x1000, scoped, tag = 'output window, operand 0, single buffered']
    %8 = vsyncpa [#allocation3], 0
    %9 = vsyncpa [#allocation6], 0
    %10 = vsyncpa [#allocation4], 0
    // Predicated region
    $region2: #{tpu_custom_call.1} parent=1 // pred_check
      _
    $region3: #{tpu_custom_call.1} parent=1 // pred_check_branch
      %12 = sbr.rel (0) target = $region5
    $region4: #{tpu_custom_call.1} parent=1 // pred_region
      %14 = vsyncadd [#allocation3], 0
      %s16 = sshll.u32 %s0, 4
      %s17 = int_to_ptr.hbm [resolvable:$true] %s16
      %s18 = sshll.u32 [#allocation2], 4
      %s19 = int_to_ptr.vmem [resolvable:$true] %s18
      %21 = dma.hbm_to_vmem [thread:$0]  %s17, 128, %s19, [#allocation3]
    $region5: #{tpu_custom_call.1} parent=1 // pred_fallthru
      _
    // Predicated region
    $region6: #{tpu_custom_call.1} parent=1 // pred_check
      _
    $region7: #{tpu_custom_call.1} parent=1 // pred_check_branch
      %23 = sbr.rel (0) target = $region9
    $region8: #{tpu_custom_call.1} parent=1 // pred_region
      %25 = vsyncadd [#allocation6], 0
      %s27 = sshll.u32 %s1, 4
      %s28 = int_to_ptr.hbm [resolvable:$true] %s27
      %s29 = sshll.u32 [#allocation5], 4
      %s30 = int_to_ptr.vmem [resolvable:$true] %s29
      %32 = dma.hbm_to_vmem [thread:$0]  %s28, 128, %s30, [#allocation6]
    $region9: #{tpu_custom_call.1} parent=1 // pred_fallthru
      _
    // Predicated region
    $region10: #{tpu_custom_call.1} parent=1 // pred_check
      _
    $region11: #{tpu_custom_call.1} parent=1 // pred_check_branch
      %34 = sbr.rel (0) target = $region13
    $region12: #{tpu_custom_call.1} parent=1 // pred_region
      %36 = vsyncadd [#allocation6], 0
      %s38 = sshll.u32 %s2, 4
      %s39 = int_to_ptr.hbm [resolvable:$true] %s38
      %s40 = sshll.u32 [#allocation7], 4
      %s41 = int_to_ptr.vmem [resolvable:$true] %s40
      %43 = dma.hbm_to_vmem [thread:$0]  %s39, 128, %s41, [#allocation6]
    $region13: #{tpu_custom_call.1} parent=1 // pred_fallthru
      _
    // Predicated region
    $region14: #{tpu_custom_call.1} parent=1 // pred_check
      _
    $region15: #{tpu_custom_call.1} parent=1 // pred_check_branch
      %45 = sbr.rel (0) target = $region17
    $region16: #{tpu_custom_call.1} parent=1 // pred_region
      %47 = dma.done [#allocation3], 128
    $region17: #{tpu_custom_call.1} parent=1 // pred_fallthru
      _
    // Predicated region
    $region18: #{tpu_custom_call.1} parent=1 // pred_check
      _
    $region19: #{tpu_custom_call.1} parent=1 // pred_check_branch
      %49 = sbr.rel (0) target = $region21
    $region20: #{tpu_custom_call.1} parent=1 // pred_region
      %51 = dma.done [#allocation6], 128
    $region21: #{tpu_custom_call.1} parent=1 // pred_fallthru
      _
    // Predicated region
    $region22: #{tpu_custom_call.1} parent=1 // pred_check
      _
    $region23: #{tpu_custom_call.1} parent=1 // pred_check_branch
      %53 = sbr.rel (0) target = $region25
    $region24: #{tpu_custom_call.1} parent=1 // pred_region
      %55 = dma.done [#allocation6], 128
    $region25: #{tpu_custom_call.1} parent=1 // pred_fallthru
      _
    %v56 = vld [vmem:[#allocation2] sm:$0xff]
    %v57 = vld [vmem:[#allocation5] sm:$0xff]
    %vm58 = vcmask 64512
    %v60 = vsel %vm58, %v56, 0
    %62 = vmatpush.msra.mxu0 0.0
    %63 = vmatpush.msra.mxu0 0.0
    %64 = vmatpush.msra.mxu0 0.0
    %65 = vmatpush.msra.mxu0 0.0
    %66 = vmatpush.msra.mxu0 0.0
    %67 = vmatpush.msra.mxu0 0.0
    %68 = vmatpush.msra.mxu0 0.0
    %69 = vmatpush.msra.mxu0 0.0
    %70 = vmatpush.msra.mxu0 0.0
    %71 = vmatpush.msra.mxu0 0.0
    %72 = vmatpush.msra.mxu0 0.0
    %73 = vmatpush.msra.mxu0 0.0
    %74 = vmatpush.msra.mxu0 0.0
    %75 = vmatpush.msra.mxu0 0.0
    %76 = vmatpush.msra.mxu0 0.0
    %v77 = vand.u32 %v57, 4294901760
    %78 = vmatpush.msra.mxu0 %v77
    %v79 = vand.u32 %v60, 4294901760
    %v80 = vsub.f32 %v60, %v79
    %v81 = vand.u32 %v80, 4294901760
    %v82 = vsub.f32 %v80, %v81
    %v83 = vand.u32 %v82, 4294901760
    %84 = vmatmul.f32.gmra.mxu0 %v83
    %v85 = vpop.f32.mrf.mxu0
    %v86 = vadd.f32 0.0, %v85
    %87 = vdwg.mxu0
    %88 = vmatpush.msra.mxu0 0.0
    %89 = vmatpush.msra.mxu0 0.0
    %90 = vmatpush.msra.mxu0 0.0
    %91 = vmatpush.msra.mxu0 0.0
    %92 = vmatpush.msra.mxu0 0.0
    %93 = vmatpush.msra.mxu0 0.0
    %94 = vmatpush.msra.mxu0 0.0
    %95 = vmatpush.msra.mxu0 0.0
    %96 = vmatpush.msra.mxu0 0.0
    %97 = vmatpush.msra.mxu0 0.0
    %98 = vmatpush.msra.mxu0 0.0
    %99 = vmatpush.msra.mxu0 0.0
    %100 = vmatpush.msra.mxu0 0.0
    %101 = vmatpush.msra.mxu0 0.0
    %102 = vmatpush.msra.mxu0 0.0
    %v103 = vand.u32 %v57, 4294901760
    %v104 = vsub.f32 %v57, %v103
    %v105 = vand.u32 %v104, 4294901760
    %v106 = vsub.f32 %v104, %v105
    %v107 = vand.u32 %v106, 4294901760
    %108 = vmatpush.msra.mxu0 %v107
    %v109 = vand.u32 %v60, 4294901760
    %110 = vmatmul.f32.gmra.mxu0 %v109
    %v111 = vpop.f32.mrf.mxu0
    %v112 = vadd.f32 %v86, %v111
    %113 = vdwg.mxu0
    %114 = vmatpush.msra.mxu0 0.0
    %115 = vmatpush.msra.mxu0 0.0
    %116 = vmatpush.msra.mxu0 0.0
    %117 = vmatpush.msra.mxu0 0.0
    %118 = vmatpush.msra.mxu0 0.0
    %119 = vmatpush.msra.mxu0 0.0
    %120 = vmatpush.msra.mxu0 0.0
    %121 = vmatpush.msra.mxu0 0.0
    %122 = vmatpush.msra.mxu0 0.0
    %123 = vmatpush.msra.mxu0 0.0
    %124 = vmatpush.msra.mxu0 0.0
    %125 = vmatpush.msra.mxu0 0.0
    %126 = vmatpush.msra.mxu0 0.0
    %127 = vmatpush.msra.mxu0 0.0
    %128 = vmatpush.msra.mxu0 0.0
    %v129 = vand.u32 %v57, 4294901760
    %v130 = vsub.f32 %v57, %v129
    %131 = vmatpush.msra.mxu0 %v130
    %v132 = vand.u32 %v60, 4294901760
    %v133 = vsub.f32 %v60, %v132
    %134 = vmatmul.f32.gmra.mxu0 %v133
    %v135 = vpop.f32.mrf.mxu0
    %v136 = vadd.f32 %v112, %v135
    %137 = vdwg.mxu0
    %138 = vmatpush.msra.mxu0 0.0
    %139 = vmatpush.msra.mxu0 0.0
    %140 = vmatpush.msra.mxu0 0.0
    %141 = vmatpush.msra.mxu0 0.0
    %142 = vmatpush.msra.mxu0 0.0
    %143 = vmatpush.msra.mxu0 0.0
    %144 = vmatpush.msra.mxu0 0.0
    %145 = vmatpush.msra.mxu0 0.0
    %146 = vmatpush.msra.mxu0 0.0
    %147 = vmatpush.msra.mxu0 0.0
    %148 = vmatpush.msra.mxu0 0.0
    %149 = vmatpush.msra.mxu0 0.0
    %150 = vmatpush.msra.mxu0 0.0
    %151 = vmatpush.msra.mxu0 0.0
    %152 = vmatpush.msra.mxu0 0.0
    %v153 = vand.u32 %v57, 4294901760
    %154 = vmatpush.msra.mxu0 %v153
    %v155 = vand.u32 %v60, 4294901760
    %v156 = vsub.f32 %v60, %v155
    %v157 = vand.u32 %v156, 4294901760
    %158 = vmatmul.f32.gmra.mxu0 %v157
    %v159 = vpop.f32.mrf.mxu0
    %v160 = vadd.f32 %v136, %v159
    %161 = vdwg.mxu0
    %162 = vmatpush.msra.mxu0 0.0
    %163 = vmatpush.msra.mxu0 0.0
    %164 = vmatpush.msra.mxu0 0.0
    %165 = vmatpush.msra.mxu0 0.0
    %166 = vmatpush.msra.mxu0 0.0
    %167 = vmatpush.msra.mxu0 0.0
    %168 = vmatpush.msra.mxu0 0.0
    %169 = vmatpush.msra.mxu0 0.0
    %170 = vmatpush.msra.mxu0 0.0
    %171 = vmatpush.msra.mxu0 0.0
    %172 = vmatpush.msra.mxu0 0.0
    %173 = vmatpush.msra.mxu0 0.0
    %174 = vmatpush.msra.mxu0 0.0
    %175 = vmatpush.msra.mxu0 0.0
    %176 = vmatpush.msra.mxu0 0.0
    %v177 = vand.u32 %v57, 4294901760
    %v178 = vsub.f32 %v57, %v177
    %v179 = vand.u32 %v178, 4294901760
    %180 = vmatpush.msra.mxu0 %v179
    %v181 = vand.u32 %v60, 4294901760
    %182 = vmatmul.f32.gmra.mxu0 %v181
    %v183 = vpop.f32.mrf.mxu0
    %v184 = vadd.f32 %v160, %v183
    %185 = vdwg.mxu0
    %186 = vmatpush.msra.mxu0 0.0
    %187 = vmatpush.msra.mxu0 0.0
    %188 = vmatpush.msra.mxu0 0.0
    %189 = vmatpush.msra.mxu0 0.0
    %190 = vmatpush.msra.mxu0 0.0
    %191 = vmatpush.msra.mxu0 0.0
    %192 = vmatpush.msra.mxu0 0.0
    %193 = vmatpush.msra.mxu0 0.0
    %194 = vmatpush.msra.mxu0 0.0
    %195 = vmatpush.msra.mxu0 0.0
    %196 = vmatpush.msra.mxu0 0.0
    %197 = vmatpush.msra.mxu0 0.0
    %198 = vmatpush.msra.mxu0 0.0
    %199 = vmatpush.msra.mxu0 0.0
    %200 = vmatpush.msra.mxu0 0.0
    %v201 = vand.u32 %v57, 4294901760
    %202 = vmatpush.msra.mxu0 %v201
    %v203 = vand.u32 %v60, 4294901760
    %204 = vmatmul.f32.gmra.mxu0 %v203
    %v205 = vpop.f32.mrf.mxu0
    %v206 = vadd.f32 %v184, %v205
    %207 = vdwg.mxu0
    %v208 = vld [vmem:[#allocation7] sm:$0x1]
    %v209 = vld [vmem:[#allocation7 + $0x1] sm:$0x1]
    %v210 = vld [vmem:[#allocation7 + $0x2] sm:$0x1]
    %v211 = vld [vmem:[#allocation7 + $0x3] sm:$0x1]
    %v212 = vld [vmem:[#allocation7 + $0x4] sm:$0x1]
    %v213 = vld [vmem:[#allocation7 + $0x5] sm:$0x1]
    %v214 = vld [vmem:[#allocation7 + $0x7] sm:$0x1]
    %v215 = vadd.f32 %v209, 1.0
    %v216 = vrcp.pop %v215
    %v217 = vmul.f32 %v215, %v216
    %v218 = vsub.f32 1.0, %v217
    %v219 = vmul.f32 %v216, %v218
    %v220 = vadd.f32 %v216, %v219
    %vm221 = vweird.f32 %v215
    %vm222 = vweird.f32 %v216
    %vm223 = vmor %vm221, %vm222
    %v224 = vsel %vm223, %v216, %v220
    %v225 = vand.u32 2147483647, %v215
    %vm226 = vcmp.eq.f32.partialorder %v225, 8.507059e+37
    %v227 = vand.u32 %v215, 2147483648
    %v228 = vor.u32 1.1754944e-38, %v227
    %v229 = vsel %vm226, %v228, %v224
    %v230 = vmul.f32 1.0, %v229
    %v231 = vmax.f32 %v214, 10.0
    %v232 = vrcp.pop %v231
    %v233 = vmul.f32 %v231, %v232
    %v234 = vsub.f32 1.0, %v233
    %v235 = vmul.f32 %v232, %v234
    %v236 = vadd.f32 %v232, %v235
    %vm237 = vweird.f32 %v231
    %vm238 = vweird.f32 %v232
    %vm239 = vmor %vm237, %vm238
    %v240 = vsel %vm239, %v232, %v236
    %v241 = vand.u32 2147483647, %v231
    %vm242 = vcmp.eq.f32.partialorder %v241, 8.507059e+37
    %v243 = vand.u32 %v231, 2147483648
    %v244 = vor.u32 1.1754944e-38, %v243
    %v245 = vsel %vm242, %v244, %v240
    %v246 = vmul.f32 1.0, %v245
    %v247 = vmul.f32 %v231, %v212
    %v248 = vmax.f32 %v247, 10.0
    %v249 = vrcp.pop %v248
    %v250 = vmul.f32 %v248, %v249
    %v251 = vsub.f32 1.0, %v250
    %v252 = vmul.f32 %v249, %v251
    %v253 = vadd.f32 %v249, %v252
    %vm254 = vweird.f32 %v248
    %vm255 = vweird.f32 %v249
    %vm256 = vmor %vm254, %vm255
    %v257 = vsel %vm256, %v249, %v253
    %v258 = vand.u32 2147483647, %v248
    %vm259 = vcmp.eq.f32.partialorder %v258, 8.507059e+37
    %v260 = vand.u32 %v248, 2147483648
    %v261 = vor.u32 1.1754944e-38, %v260
    %v262 = vsel %vm259, %v261, %v257
    %v263 = vmul.f32 1.0, %v262
    %v264 = vmul.f32 %v208, %v211
    %v265 = vmul.f32 %v264, %v230
    %v266 = vmul.f32 %v208, %v230
    %v267 = vmul.f32 %v266, %v210
    %v268 = vmul.f32 %v266, %v211
    %v269 = vmul.f32 %v248, %v246
    %v270 = vlog2.pop %v269
    %v271 = vmul.f32 %v270, 0.6931472
    %v272 = vmul.f32 %v268, %v271
    %v273 = vsub.f32 100.0, %v213
    %v274 = vmul.f32 %v273, 0.01
    %v275 = vmax.f32 %v274, 0.0
    %v276 = vmin.f32 %v275, 1.0
    %v277 = vmul.f32 %v276, 0.5
    %v278 = vadd.f32 %v277, 0.5
    %v279 = vmul.f32 %v210, %v215
    %v280 = vmul.f32 %v279, %v273
    %v281 = vmul.f32 %v280, 0.01
    %vm282 = vcmp.gt.f32.partialorder %v281, 0.0
    %v283 = vsel %vm282, 1.0, %v281
    %v284 = vmul.f32 %v278, %v283
    %v285 = vmul.f32 %v284, 1000.0
    %v286 = vperm.slane %v231, 0
    %v287 = vadd.f32 %v286, %v206
    %v288 = vmax.f32 %v287, 10.0
    %v289 = vperm.slane %v246, 0
    %v290 = vmul.f32 %v288, %v289
    %v291 = vlog2.pop %v290
    %v292 = vmul.f32 %v291, 0.6931472
    %v293 = vperm.slane %v265, 0
    %v294 = vmul.f32 %v293, %v292
    %v295 = vperm.slane %v263, 0
    %v296 = vmul.f32 %v288, %v295
    %v297 = vlog2.pop %v296
    %v298 = vmul.f32 %v297, 0.6931472
    %v299 = vperm.slane %v267, 0
    %v300 = vmul.f32 %v299, %v298
    %v301 = vperm.slane %v272, 0
    %v302 = vadd.f32 %v301, %v300
    %v303 = vperm.slane %v248, 0
    %vm304 = vcmp.le.f32.partialorder %v288, %v303
    %v305 = vsel %vm304, %v294, %v302
    %v306 = vand.u32 2147483647, %v206
    %vm307 = vcmp.lt.f32.partialorder %v306, 1e-06
    %v308 = vperm.slane %v285, 0
    %v309 = vmul.f32 %v305, %v308
    %v310 = vsel %vm307, 0.0, %v309
    %311 = vst [vmem:[#allocation8] sm:$0xff] %v310
    // Predicated region
    $region26: #{tpu_custom_call.1} parent=1 // pred_check
      _
    $region27: #{tpu_custom_call.1} parent=1 // pred_check_branch
      %313 = sbr.rel (0) target = $region29
    $region28: #{tpu_custom_call.1} parent=1 // pred_region
      %315 = vsyncadd [#allocation4], 0
      %s317 = sshll.u32 [#allocation8], 4
      %s318 = int_to_ptr.vmem [resolvable:$true] %s317
      %s319 = sshll.u32 %s3, 4
      %s320 = int_to_ptr.hbm [resolvable:$true] %s319
      %322 = dma.vmem_to_hbm [thread:$0]  %s318, 128, %s320, [#allocation4]
    $region29: #{tpu_custom_call.1} parent=1 // pred_fallthru
      _
    // Predicated region
    $region30: #{tpu_custom_call.1} parent=1 // pred_check
      _
    $region31: #{tpu_custom_call.1} parent=1 // pred_check_branch
      %324 = sbr.rel (0) target = $region33
    $region32: #{tpu_custom_call.1} parent=1 // pred_region
      %326 = dma.done [#allocation4], 128
    $region33: #{tpu_custom_call.1} parent=1 // pred_fallthru
      _
    %327 = vsyncpa [#allocation3], 1
    %328 = vsyncpa [#allocation6], 1
    %329 = vsyncpa [#allocation4], 1

</llo_original>
